<compile_context>
chip_gen: v7x
topology: tpu7x:2x2x1
jax: 0.10.0
libtpu: 0.0.40
codegen_flags: <defaults>
</compile_context>

<pallas_src>
import jax
import jax.numpy as jnp
import numpy as np
from jax.experimental import pallas as pl
from jax.experimental.pallas import tpu as pltpu


def gstf_kernel(c0_ref, x_ref, v_ref, out_ref):
    # c0_ref : SMEM f32[1]        c0 = Beta * sum(Q ⊗ W) + b
    # x_ref  : VMEM (tb, TCp)     flattened batch tile (zero-padded lanes)
    # v_ref  : VMEM (TCp, 1)      v = Gamma * flatten(Q ⊗ W) column (grid-resident)
    # out_ref: VMEM (tb, 2)       column 0 = s, column 1 = h
    h = jnp.dot(x_ref[...], v_ref[...],
                preferred_element_type=jnp.float32) + c0_ref[0]   # (tb, 1), MXU
    out_ref[...] = jnp.concatenate([jax.nn.sigmoid(h), h], axis=-1)  # one store


def _round_up(x, m):
    return ((x + m - 1) // m) * m


def _pick_block_b(B, TCp, target_bytes):
    """Batch-tile rows: big enough to amortize per-step overhead (multi-MiB
    per buffer), small enough for v7x's 64 MiB VMEM, and leaving >= 2 grid
    steps when possible so the 'parallel' axis can shard across TensorCores."""
    bytes_per_row = 4 * TCp
    tb = max(8, (target_bytes // bytes_per_row) // 8 * 8)
    if B > 8:
        # Force at least 2 grid steps (dual-TC on v7x) when the batch allows it.
        tb = min(tb, _round_up((B + 1) // 2, 8))
    if tb >= B:
        tb = B          # whole batch in one step; block == full array dims
    return tb


def model_gstf_forward(x, W_global, Q_global, b_global, Gamma_global, Beta_global,
                       *, target_tile_bytes=4 << 20):
    """x: (B, N_time, N_chan) float32.  Returns (s, h), each (B, 1) float32."""
    B, T, C = x.shape
    TC = T * C
    TCp = _round_up(TC, 128)                              # keep rows lane-dense

    x2d = x.reshape(B, TC).astype(jnp.float32)
    if TCp != TC:
        x2d = jnp.pad(x2d, ((0, 0), (0, TCp - TC)))

    # Fused weight column and additive constant (exact reassociation of the
    # two reference matmuls; matches at f32 rtol ~1e-5).
    qw = (Q_global.reshape(T, 1) * W_global.reshape(1, C)).reshape(TC)
    qw = qw.astype(jnp.float32)
    v = Gamma_global[0] * qw
    if TCp != TC:
        v = jnp.pad(v, (0, TCp - TC))
    v = v.reshape(TCp, 1).astype(jnp.float32)             # column -> MXU dot
    c0 = (Beta_global[0] * jnp.sum(qw) + b_global[0]).reshape(1).astype(jnp.float32)

    tb = _pick_block_b(B, TCp, target_tile_bytes)
    grid = (pl.cdiv(B, tb),)

    # VMEM budget: double-buffered x tile + double-buffered out tile + v + margin.
    vmem_bytes = 2 * tb * TCp * 4 + 2 * tb * 2 * 4 + TCp * 4 + (2 << 20)
    vmem_bytes = int(min(max(vmem_bytes, 16 << 20), 64 << 20))

    cost = pl.CostEstimate(
        flops=2 * B * TCp + 2 * B,
        transcendentals=B,
        bytes_accessed=4 * (B * TCp + TCp + 2 * B + 1),
    )

    out = pl.pallas_call(
        gstf_kernel,
        out_shape=jax.ShapeDtypeStruct((B, 2), jnp.float32),
        grid_spec=pltpu.PrefetchScalarGridSpec(
            num_scalar_prefetch=0,
            grid=grid,
            in_specs=[
                pl.BlockSpec(memory_space=pltpu.MemorySpace.SMEM),   # c0 scalar
                pl.BlockSpec((tb, TCp), lambda i: (i, 0)),           # x batch tile
                pl.BlockSpec((TCp, 1), lambda i: (0, 0)),            # v (resident)
            ],
            out_specs=pl.BlockSpec((tb, 2), lambda i: (i, 0)),
        ),
        compiler_params=pltpu.CompilerParams(
            dimension_semantics=("parallel",),
            vmem_limit_bytes=vmem_bytes,
        ),
        cost_estimate=cost,
    )(c0, x2d, v)

    s = out[:, 0:1]
    h = out[:, 1:2]
    return s, h


if __name__ == "__main__":
    key = jax.random.PRNGKey(0)
    B, N_time, N_chan = 2, 16, 8          # T*C = 128 -> full lane width
    kx, kw, kq = jax.random.split(key, 3)

    # Inputs
    x = jax.random.normal(kx, (B, N_time, N_chan), dtype=jnp.float32)

    # Deterministic parameter init matching the module's __init__
    W_global = 0.01 * jax.random.normal(kw, (N_chan, 1), dtype=jnp.float32)
    Q_global = 0.01 * jax.random.normal(kq, (N_time, 1), dtype=jnp.float32)
    b_global = jnp.zeros((1,), jnp.float32)
    Gamma_global = jnp.ones((1,), jnp.float32)
    Beta_global = jnp.zeros((1,), jnp.float32)

    s, h = model_gstf_forward(
        x, W_global, Q_global, b_global, Gamma_global, Beta_global
    )
    jax.block_until_ready((s, h))

    # Pure-JAX reference check (mirrors the torch forward exactly)
    xa = Gamma_global[0] * x + Beta_global[0]
    h_ref = (xa @ W_global)[..., 0] @ Q_global + b_global[0]    # (B, 1)
    s_ref = jax.nn.sigmoid(h_ref)
    np.testing.assert_allclose(np.asarray(h), np.asarray(h_ref), rtol=1e-5, atol=1e-6)
    np.testing.assert_allclose(np.asarray(s), np.asarray(s_ref), rtol=1e-5, atol=1e-6)

    print("KERNEL_OK")
</pallas_src>

<mosaic_0001>
module attributes {stable_mosaic.version = 11 : i64} {
  func.func @gstf_kernel(%arg0: i32, %arg1: memref<1xf32, #tpu.memory_space<smem>>, %arg2: memref<2x128xf32, #tpu.memory_space<vmem>>, %arg3: memref<128x1xf32, #tpu.memory_space<vmem>>, %arg4: memref<2x2xf32, #tpu.memory_space<vmem>>) attributes {dimension_semantics = [#tpu.dimension_semantics<parallel>], iteration_bounds = array<i64: 1>, scalar_prefetch = 0 : i64, scratch_operands = 0 : i64, tpu.core_type = #tpu.core_type<tc>, window_params = [{transform_indices = @transform_0, window_bounds = array<i64: 1>}, {transform_indices = @transform_1, window_bounds = array<i64: 2, 128>}, {pipeline_mode = #tpu.pipeline_mode<synchronous>, transform_indices = @transform_2, window_bounds = array<i64: 128, 1>}, {transform_indices = @transform_3, window_bounds = array<i64: 2, 2>}]} {
    %c0 = arith.constant 0 : index
    %c0_0 = arith.constant 0 : index
    %0 = vector.load %arg2[%c0, %c0_0] : memref<2x128xf32, #tpu.memory_space<vmem>>, vector<2x128xf32>
    %c0_1 = arith.constant 0 : index
    %c0_2 = arith.constant 0 : index
    %1 = vector.load %arg3[%c0_1, %c0_2] : memref<128x1xf32, #tpu.memory_space<vmem>>, vector<128x1xf32>
    %cst = arith.constant dense<0.000000e+00> : vector<2x1xf32>
    %2 = tpu.matmul %0, %1, %cst {dimension_numbers = #tpu.dot_dimension_numbers<[1], [0], [0], [1], [0, 0, 1, 1], [], []>} : vector<2x128xf32>, vector<128x1xf32>, vector<2x1xf32> -> vector<2x1xf32>
    %c0_3 = arith.constant 0 : index
    %3 = memref.load %arg1[%c0_3] : memref<1xf32, #tpu.memory_space<smem>>
    %4 = vector.broadcast %3 : f32 to vector<2x1xf32>
    %5 = arith.addf %2, %4 : vector<2x1xf32>
    %6 = arith.negf %5 : vector<2x1xf32>
    %7 = math.exp %6 : vector<2x1xf32>
    %cst_4 = arith.constant 1.000000e+00 : f32
    %8 = vector.broadcast %cst_4 : f32 to vector<2x1xf32>
    %9 = arith.addf %8, %7 : vector<2x1xf32>
    %10 = arith.divf %8, %9 : vector<2x1xf32>
    %11 = tpu.concatenate %10, %5 in 1 : vector<2x1xf32>, vector<2x1xf32> -> vector<2x2xf32>
    %c0_5 = arith.constant 0 : index
    %c0_6 = arith.constant 0 : index
    %12 = vector.load %arg4[%c0_5, %c0_6] : memref<2x2xf32, #tpu.memory_space<vmem>>, vector<2x2xf32>
    tpu.vector_store %arg4[%c0_5, %c0_6], %11 {strides = array<i32>} : memref<2x2xf32, #tpu.memory_space<vmem>>, vector<2x2xf32>,
    return
  }
  func.func @transform_0(%arg0: i32) -> i32 {
    %c0_i32 = arith.constant 0 : i32
    %c0_i32_0 = arith.constant 0 : i32
    return %c0_i32 : i32
  }
  func.func @transform_1(%arg0: i32) -> (i32, i32) {
    %c0_i32 = arith.constant 0 : i32
    %c0_i32_0 = arith.constant 0 : i32
    return %arg0, %c0_i32 : i32, i32
  }
  func.func @transform_2(%arg0: i32) -> (i32, i32) {
    %c0_i32 = arith.constant 0 : i32
    %c0_i32_0 = arith.constant 0 : i32
    %c0_i32_1 = arith.constant 0 : i32
    return %c0_i32, %c0_i32_0 : i32, i32
  }
  func.func @transform_3(%arg0: i32) -> (i32, i32) {
    %c0_i32 = arith.constant 0 : i32
    %c0_i32_0 = arith.constant 0 : i32
    return %arg0, %c0_i32 : i32, i32
  }
}

</mosaic_0001>

<llo_original>
// kernel: tpu_custom_call.1
$region0: #{tpu_custom_call.1}
  #allocation0 [shape = 'u32[]', space=smem, size = 0x4, offset = 0x4, fixed_abs, tag = 'smem constant byte address 0x4 - core index']
  #allocation1 [shape = 'u32[144,128]{1,0:T(1,128)}', space=vmem, size = 0x12000, scoped, tag = 'internal scratch']
  #allocation2 [shape = 'f32[1]{0:T(128)S(6)}', space=smem, size = 0x200, scoped, tag = 'scoped memory for tpu_custom_call.1']
  %s0 = inlined_call_operand.<no memory space> [shape: f32[1], index: 0, kind: input, shape index: {}]
  %s1 = inlined_call_operand.vmem [shape: f32[2,128], index: 1, kind: input, shape index: {}]
  %s2 = inlined_call_operand.vmem [shape: f32[128,1], index: 2, kind: input, shape index: {}]
  %s3 = inlined_call_operand.hbm [shape: f32[2,2], index: 3, kind: output, shape index: {}]
  %s4 = sld [smem:[#allocation0]]
  $region22: #{tpu_custom_call.1} parent=0
    _
  %s6 = ssub.s32 1, %s4
  %s7 = scalar_select 0, %s6, %s4
  %8 = sst [smem:[#allocation2]] %s0
  $region1: #{tpu_custom_call.1} parent=0
    #allocation3 [shape = 'u8[1024]{0}', space=vmem, size = 0x400, scoped, tag = 'output window, operand 0, single buffered']
    #allocation4 [shape = 's32[1]{0}', space=sflag, size = 0x4, scoped, tag = 'scoped memory for tpu_custom_call.1']
    %9 = vsyncpa [#allocation4], 0
    // Predicated region
    $region2: #{tpu_custom_call.1} parent=1 // pred_check
      _
    $region3: #{tpu_custom_call.1} parent=1 // pred_check_branch
      %11 = sbr.rel (0) target = $region5
    $region4: #{tpu_custom_call.1} parent=1 // pred_region
      _
    $region5: #{tpu_custom_call.1} parent=1 // pred_fallthru
      _
    // Predicated region
    $region6: #{tpu_custom_call.1} parent=1 // pred_check
      _
    $region7: #{tpu_custom_call.1} parent=1 // pred_check_branch
      %13 = sbr.rel (0) target = $region9
    $region8: #{tpu_custom_call.1} parent=1 // pred_region
      _
    $region9: #{tpu_custom_call.1} parent=1 // pred_fallthru
      _
    // Predicated region
    $region10: #{tpu_custom_call.1} parent=1 // pred_check
      _
    $region11: #{tpu_custom_call.1} parent=1 // pred_check_branch
      %15 = sbr.rel (0) target = $region13
    $region12: #{tpu_custom_call.1} parent=1 // pred_region
      _
    $region13: #{tpu_custom_call.1} parent=1 // pred_fallthru
      _
    %v16 = vld [vmem:[%s1] sm:$0x3]
    %v17 = vld [vmem:[%s2] sm:$0xff]
    %v18 = vld [vmem:[%s2 + $0x8] sm:$0xff]
    %v19 = vld [vmem:[%s2 + $0x10] sm:$0xff]
    %v20 = vld [vmem:[%s2 + $0x18] sm:$0xff]
    %v21 = vld [vmem:[%s2 + $0x20] sm:$0xff]
    %v22 = vld [vmem:[%s2 + $0x28] sm:$0xff]
    %v23 = vld [vmem:[%s2 + $0x30] sm:$0xff]
    %v24 = vld [vmem:[%s2 + $0x38] sm:$0xff]
    %v25 = vld [vmem:[%s2 + $0x40] sm:$0xff]
    %v26 = vld [vmem:[%s2 + $0x48] sm:$0xff]
    %v27 = vld [vmem:[%s2 + $0x50] sm:$0xff]
    %v28 = vld [vmem:[%s2 + $0x58] sm:$0xff]
    %v29 = vld [vmem:[%s2 + $0x60] sm:$0xff]
    %v30 = vld [vmem:[%s2 + $0x68] sm:$0xff]
    %v31 = vld [vmem:[%s2 + $0x70] sm:$0xff]
    %v32 = vld [vmem:[%s2 + $0x78] sm:$0xff]
    %s33 = sld [smem:[#allocation2]]
    %v34 = vstv %s33
    %35 = vmatprep.subr.mxu0 0.0
    %36 = vmatpush1.msra.mxu0 %v17
    %37 = vmatprep.subr.mxu0 0.0
    %38 = vmatpush1.msra.mxu0 %v18
    %39 = vmatprep.subr.mxu0 0.0
    %40 = vmatpush1.msra.mxu0 %v19
    %41 = vmatprep.subr.mxu0 0.0
    %42 = vmatpush1.msra.mxu0 %v20
    %43 = vmatprep.subr.mxu0 0.0
    %44 = vmatpush1.msra.mxu0 %v21
    %45 = vmatprep.subr.mxu0 0.0
    %46 = vmatpush1.msra.mxu0 %v22
    %47 = vmatprep.subr.mxu0 0.0
    %48 = vmatpush1.msra.mxu0 %v23
    %49 = vmatprep.subr.mxu0 0.0
    %50 = vmatpush1.msra.mxu0 %v24
    %51 = vmatprep.subr.mxu0 0.0
    %52 = vmatpush1.msra.mxu0 %v25
    %53 = vmatprep.subr.mxu0 0.0
    %54 = vmatpush1.msra.mxu0 %v26
    %55 = vmatprep.subr.mxu0 0.0
    %56 = vmatpush1.msra.mxu0 %v27
    %57 = vmatprep.subr.mxu0 0.0
    %58 = vmatpush1.msra.mxu0 %v28
    %59 = vmatprep.subr.mxu0 0.0
    %60 = vmatpush1.msra.mxu0 %v29
    %61 = vmatprep.subr.mxu0 0.0
    %62 = vmatpush1.msra.mxu0 %v30
    %63 = vmatprep.subr.mxu0 0.0
    %64 = vmatpush1.msra.mxu0 %v31
    %65 = vmatprep.subr.mxu0 0.0
    %66 = vmatpush1.msra.mxu0 %v32
    %67 = vmatprep.subr.mxu0 0.0
    %68 = vmatpush1.msra.mxu0 0.0
    %69 = vmatprep.subr.mxu0 0.0
    %70 = vmatpush1.msra.mxu0 0.0
    %71 = vmatprep.subr.mxu0 0.0
    %72 = vmatpush1.msra.mxu0 0.0
    %73 = vmatprep.subr.mxu0 0.0
    %74 = vmatpush1.msra.mxu0 0.0
    %75 = vmatprep.subr.mxu0 0.0
    %76 = vmatpush1.msra.mxu0 0.0
    %77 = vmatprep.subr.mxu0 0.0
    %78 = vmatpush1.msra.mxu0 0.0
    %79 = vmatprep.subr.mxu0 0.0
    %80 = vmatpush1.msra.mxu0 0.0
    %81 = vmatprep.subr.mxu0 0.0
    %82 = vmatpush1.msra.mxu0 0.0
    %83 = vmatprep.subr.mxu0 0.0
    %84 = vmatpush1.msra.mxu0 0.0
    %85 = vmatprep.subr.mxu0 0.0
    %86 = vmatpush1.msra.mxu0 0.0
    %87 = vmatprep.subr.mxu0 0.0
    %88 = vmatpush1.msra.mxu0 0.0
    %89 = vmatprep.subr.mxu0 0.0
    %90 = vmatpush1.msra.mxu0 0.0
    %91 = vmatprep.subr.mxu0 0.0
    %92 = vmatpush1.msra.mxu0 0.0
    %93 = vmatprep.subr.mxu0 0.0
    %94 = vmatpush1.msra.mxu0 0.0
    %95 = vmatprep.subr.mxu0 0.0
    %96 = vmatpush1.msra.mxu0 0.0
    %97 = vmatprep.subr.mxu0 0.0
    %98 = vmatpush1.msra.mxu0 0.0
    %99 = vmatprep.mubr.f32.mxu0 0.0
    %100 = vmatmul.mubr.f32.gmra.mrb[0].mxu0 %v16
    %v101 = vpop.f32.mrb[0].mxu0
    %v102 = vadd.f32 %v34, %v101
    %v103 = vpop.f32.mrb[0].mxu0
    %104 = vdwg.mxu0
    %v105 = vxor.u32 %v102, 2147483648
    %v106 = vmul.f32 %v105, 1.442695
    %v107 = vpow.pop %v106
    %v108 = vadd.f32 %v107, 1.0
    %v109 = vrcp.pop %v108
    %v110 = vmul.f32 1.0, %v109
    %112 = vrot.lane.b32.xlu0 %v102, 1
    %v113 = vpop.permute.xlu0 %112
    %vm115 = vcmask 7168
    %v116 = vsel %vm115, %v110, %v113
    %vm117 = vcmask 9216
    %118 = vst.msk [vmem:[#allocation3] sm:$0x3] %vm117, %v116
    // Predicated region
    $region14: #{tpu_custom_call.1} parent=1 // pred_check
      _
    $region15: #{tpu_custom_call.1} parent=1 // pred_check_branch
      %120 = sbr.rel (0) target = $region17
    $region16: #{tpu_custom_call.1} parent=1 // pred_region
      %s122 = ssub.s32 32, 32
      %123 = vsyncadd [#allocation4], %s122
      %s125 = sshll.u32 [#allocation3], 4
      %s126 = int_to_ptr.vmem [resolvable:$true] %s125
      %128 = dma.vmem_to_hbm [thread:$0]  %s126, 32, %s3, [#allocation4]
    $region17: #{tpu_custom_call.1} parent=1 // pred_fallthru
      _
    // Predicated region
    $region18: #{tpu_custom_call.1} parent=1 // pred_check
      _
    $region19: #{tpu_custom_call.1} parent=1 // pred_check_branch
      %130 = sbr.rel (0) target = $region21
    $region20: #{tpu_custom_call.1} parent=1 // pred_region
      %131 = dma.done [#allocation4], 32
    $region21: #{tpu_custom_call.1} parent=1 // pred_fallthru
      _
    %132 = vsyncpa [#allocation4], 1

</llo_original>
